<compile_context>
chip_gen: v6e
topology: v6e:2x2x1
jax: 0.10.0
libtpu: 0.0.40
codegen_flags: <defaults>
</compile_context>

<pallas_src>
import functools
import math

import jax
import jax.numpy as jnp
from jax import lax
from jax.experimental import pallas as pl
from jax.experimental.pallas import tpu as pltpu


def mhsa_kernel(x_ref, wqkv_ref, wo_ref, bo_ref, o_ref, acc_ref, *,
                n_heads: int, d_k: int, n_batches: int, seq_len: int):
    """Single-invocation kernel over the flattened token axis.

    x_ref    : (B*S, D)   activations (batch flattened into rows)
    wqkv_ref : (D, 3D)    pre-transposed fused [Wq.T*scale | Wk.T | Wv.T]
    wo_ref   : (D, D)     pre-transposed Wo.T
    bo_ref   : (1, D)     output-projection bias
    o_ref    : (B*S, D)   output
    acc_ref  : (B*S, D)   f32 VMEM scratch for per-head attention outputs
    """
    x = x_ref[...]                                    # (N, D), N = B*S
    N, D = x.shape

    # Fused Q/K/V projection: one wide MXU pass (N rows, K=D, width 3D).
    qkv = jnp.dot(x, wqkv_ref[...], preferred_element_type=jnp.float32)   # (N, 3D)
    q = qkv[:, :D]                                    # 1/sqrt(d_k) already folded in
    k = qkv[:, D:2 * D]
    v = qkv[:, 2 * D:3 * D]

    # Block-diagonal causal additive bias over the flattened token axis:
    # token `row` may attend token `col` iff same batch and col <= row.
    # Built once per invocation from static comparisons only.
    row = lax.broadcasted_iota(jnp.int32, (N, N), 0)
    col = lax.broadcasted_iota(jnp.int32, (N, N), 1)
    same_batch = (row < 0)                            # all-False start
    for b in range(n_batches):
        lo_t, hi_t = b * seq_len, (b + 1) * seq_len
        same_batch = same_batch | (
            (row >= lo_t) & (row < hi_t) & (col >= lo_t) & (col < hi_t))
    allowed = same_batch & (col <= row)
    # Large finite negative instead of -inf: exp underflows to exactly 0 and a
    # fully-masked row (impossible for pure causal) would not produce NaN.
    bias = jnp.where(allowed, jnp.float32(0.0), jnp.float32(-1e30))       # (N, N)

    # Static unroll over heads; everything stays in lane-dense 2D tiles.
    for h in range(n_heads):
        lo = h * d_k
        qh = q[:, lo:lo + d_k]                        # (N, d_k)
        kh = k[:, lo:lo + d_k]
        vh = v[:, lo:lo + d_k]

        # scores = qh @ kh^T without materializing a transpose
        # (contract dim 1 vs dim 1).
        s = lax.dot_general(qh, kh, (((1,), (1,)), ((), ())),
                            preferred_element_type=jnp.float32)           # (N, N)
        s = s + bias

        # Numerically-stable softmax in f32 (exact divide per review note).
        m = jnp.max(s, axis=-1, keepdims=True)
        e = jnp.exp(s - m)
        p = e / jnp.sum(e, axis=-1, keepdims=True)

        # Write this head's output straight into its lane slice of the scratch
        # (no list + concatenate relayout).
        acc_ref[:, lo:lo + d_k] = jnp.dot(p, vh, preferred_element_type=jnp.float32)

    # Output projection (weights pre-transposed) + bias, one MXU call.
    y = jnp.dot(acc_ref[...], wo_ref[...], preferred_element_type=jnp.float32)
    o_ref[...] = (y + bo_ref[...]).astype(o_ref.dtype)


def multi_head_self_attention(x, wq, wk, wv, wo, bo, *, n_heads: int):
    """x: (B, S, D); wq/wk/wv/wo: (D, D) stored PyTorch-style (out, in); bo: (D,)."""
    B, S, D = x.shape
    d_k = D // n_heads
    scale = 1.0 / math.sqrt(d_k)

    # One-time weight prep (constant-folded under jit): transpose to (in, out),
    # fold the softmax scale into Wq, fuse Q/K/V into one (D, 3D) MXU operand.
    # TODO(synk): at non-toy sizes cast these + x to bf16 for the v6e/v7x MXU
    # (keep preferred_element_type=f32); kept f32 here for exact parity.
    wqkv_t = jnp.concatenate([wq.T * scale, wk.T, wv.T], axis=1)   # (D, 3D)
    wo_t = wo.T                                                    # (D, D)
    bo2 = bo.reshape(1, D)

    x2 = x.reshape(B * S, D)   # free leading-dim reshape, done by XLA

    kernel = functools.partial(mhsa_kernel, n_heads=n_heads, d_k=d_k,
                               n_batches=B, seq_len=S)

    y = pl.pallas_call(
        kernel,
        out_shape=jax.ShapeDtypeStruct((B * S, D), x.dtype),
        in_specs=[
            pl.BlockSpec(memory_space=pltpu.MemorySpace.VMEM),   # x (B*S, D)
            pl.BlockSpec(memory_space=pltpu.MemorySpace.VMEM),   # fused QKV weights
            pl.BlockSpec(memory_space=pltpu.MemorySpace.VMEM),   # Wo.T
            pl.BlockSpec(memory_space=pltpu.MemorySpace.VMEM),   # out-proj bias
        ],
        out_specs=pl.BlockSpec(memory_space=pltpu.MemorySpace.VMEM),
        scratch_shapes=[pltpu.VMEM((B * S, D), jnp.float32)],
    )(x2, wqkv_t, wo_t, bo2)

    return y.reshape(B, S, D)


def reference_mhsa(x, wq, wk, wv, wo, bo, *, n_heads: int):
    """Pure-JAX reference matching the PyTorch forward (eval mode)."""
    B, S, D = x.shape
    d_k = D // n_heads
    q = x @ wq.T
    k = x @ wk.T
    v = x @ wv.T
    q = q.reshape(B, S, n_heads, d_k).transpose(0, 2, 1, 3)
    k = k.reshape(B, S, n_heads, d_k).transpose(0, 2, 1, 3)
    v = v.reshape(B, S, n_heads, d_k).transpose(0, 2, 1, 3)
    scores = jnp.einsum('bhqd,bhkd->bhqk', q, k) / math.sqrt(d_k)
    mask = jnp.triu(jnp.ones((S, S), dtype=bool), k=1)
    scores = jnp.where(mask[None, None], -jnp.inf, scores)
    attn = jax.nn.softmax(scores, axis=-1)
    out = jnp.einsum('bhqk,bhkd->bhqd', attn, v)
    out = out.transpose(0, 2, 1, 3).reshape(B, S, D)
    return out @ wo.T + bo


if __name__ == "__main__":
    # Small shapes consistent with the module: batch=2, seq=8, d_model=32, heads=4.
    B, S, D, H = 2, 8, 32, 4

    key = jax.random.PRNGKey(0)
    kx, kq, kk, kv, ko, kb = jax.random.split(key, 6)
    bound = 1.0 / math.sqrt(D)

    x = jax.random.normal(kx, (B, S, D), dtype=jnp.float32)
    wq = jax.random.uniform(kq, (D, D), jnp.float32, -bound, bound)
    wk = jax.random.uniform(kk, (D, D), jnp.float32, -bound, bound)
    wv = jax.random.uniform(kv, (D, D), jnp.float32, -bound, bound)
    wo = jax.random.uniform(ko, (D, D), jnp.float32, -bound, bound)
    bo = jax.random.uniform(kb, (D,), jnp.float32, -bound, bound)

    out = multi_head_self_attention(x, wq, wk, wv, wo, bo, n_heads=H)
    out = jax.block_until_ready(out)

    ref = reference_mhsa(x, wq, wk, wv, wo, bo, n_heads=H)
    assert out.shape == (B, S, D)
    # Tolerance covers precision differences between the Pallas MXU f32 path and
    # XLA's default-precision f32 matmuls in the reference.
    assert jnp.allclose(out, ref, atol=2e-3, rtol=2e-3), \
        f"max abs diff {jnp.max(jnp.abs(out - ref))}"

    print("KERNEL_OK")
</pallas_src>

<mosaic_0001>
module attributes {stable_mosaic.version = 11 : i64} {
  func.func @mhsa_kernel(%arg0: memref<16x32xf32, #tpu.memory_space<vmem>>, %arg1: memref<32x96xf32, #tpu.memory_space<vmem>>, %arg2: memref<32x32xf32, #tpu.memory_space<vmem>>, %arg3: memref<1x32xf32, #tpu.memory_space<vmem>>, %arg4: memref<16x32xf32, #tpu.memory_space<vmem>>, %arg5: memref<16x32xf32, #tpu.memory_space<vmem>>) attributes {dimension_semantics = [], scalar_prefetch = 0 : i64, scratch_operands = 1 : i64, tpu.core_type = #tpu.core_type<tc>} {
    %c0 = arith.constant 0 : index
    %c0_0 = arith.constant 0 : index
    %0 = vector.load %arg0[%c0, %c0_0] : memref<16x32xf32, #tpu.memory_space<vmem>>, vector<16x32xf32>
    %c0_1 = arith.constant 0 : index
    %c0_2 = arith.constant 0 : index
    %1 = vector.load %arg1[%c0_1, %c0_2] : memref<32x96xf32, #tpu.memory_space<vmem>>, vector<32x96xf32>
    %cst = arith.constant dense<0.000000e+00> : vector<16x96xf32>
    %2 = tpu.matmul %0, %1, %cst {dimension_numbers = #tpu.dot_dimension_numbers<[1], [0], [0], [1], [0, 0, 1, 1], [], []>} : vector<16x32xf32>, vector<32x96xf32>, vector<16x96xf32> -> vector<16x96xf32>
    %3 = vector.extract_strided_slice %2 {offsets = [0, 0], sizes = [16, 32], strides = [1, 1]} : vector<16x96xf32> to vector<16x32xf32>
    %4 = vector.extract_strided_slice %2 {offsets = [0, 32], sizes = [16, 32], strides = [1, 1]} : vector<16x96xf32> to vector<16x32xf32>
    %5 = vector.extract_strided_slice %2 {offsets = [0, 64], sizes = [16, 32], strides = [1, 1]} : vector<16x96xf32> to vector<16x32xf32>
    %6 = tpu.iota {dimensions = array<i32: 0>} : vector<16x16xi32>
    %7 = tpu.iota {dimensions = array<i32: 1>} : vector<16x16xi32>
    %c0_i32 = arith.constant 0 : i32
    %8 = vector.broadcast %c0_i32 : i32 to vector<16x16xi32>
    %9 = arith.cmpi slt, %6, %8 : vector<16x16xi32>
    %c0_i32_3 = arith.constant 0 : i32
    %10 = vector.broadcast %c0_i32_3 : i32 to vector<16x16xi32>
    %11 = arith.cmpi sge, %6, %10 : vector<16x16xi32>
    %c8_i32 = arith.constant 8 : i32
    %12 = vector.broadcast %c8_i32 : i32 to vector<16x16xi32>
    %13 = arith.cmpi slt, %6, %12 : vector<16x16xi32>
    %14 = arith.andi %11, %13 : vector<16x16xi1>
    %c0_i32_4 = arith.constant 0 : i32
    %15 = vector.broadcast %c0_i32_4 : i32 to vector<16x16xi32>
    %16 = arith.cmpi sge, %7, %15 : vector<16x16xi32>
    %17 = arith.andi %14, %16 : vector<16x16xi1>
    %c8_i32_5 = arith.constant 8 : i32
    %18 = vector.broadcast %c8_i32_5 : i32 to vector<16x16xi32>
    %19 = arith.cmpi slt, %7, %18 : vector<16x16xi32>
    %20 = arith.andi %17, %19 : vector<16x16xi1>
    %21 = arith.ori %9, %20 : vector<16x16xi1>
    %c8_i32_6 = arith.constant 8 : i32
    %22 = vector.broadcast %c8_i32_6 : i32 to vector<16x16xi32>
    %23 = arith.cmpi sge, %6, %22 : vector<16x16xi32>
    %c16_i32 = arith.constant 16 : i32
    %24 = vector.broadcast %c16_i32 : i32 to vector<16x16xi32>
    %25 = arith.cmpi slt, %6, %24 : vector<16x16xi32>
    %26 = arith.andi %23, %25 : vector<16x16xi1>
    %c8_i32_7 = arith.constant 8 : i32
    %27 = vector.broadcast %c8_i32_7 : i32 to vector<16x16xi32>
    %28 = arith.cmpi sge, %7, %27 : vector<16x16xi32>
    %29 = arith.andi %26, %28 : vector<16x16xi1>
    %c16_i32_8 = arith.constant 16 : i32
    %30 = vector.broadcast %c16_i32_8 : i32 to vector<16x16xi32>
    %31 = arith.cmpi slt, %7, %30 : vector<16x16xi32>
    %32 = arith.andi %29, %31 : vector<16x16xi1>
    %33 = arith.ori %21, %32 : vector<16x16xi1>
    %34 = arith.cmpi sle, %7, %6 : vector<16x16xi32>
    %35 = arith.andi %33, %34 : vector<16x16xi1>
    %cst_9 = arith.constant 0.000000e+00 : f32
    %cst_10 = arith.constant -1.000000e+30 : f32
    %36 = vector.broadcast %cst_9 : f32 to vector<16x16xf32>
    %37 = vector.broadcast %cst_10 : f32 to vector<16x16xf32>
    %38 = arith.select %35, %36, %37 : vector<16x16xi1>, vector<16x16xf32>
    %39 = vector.extract_strided_slice %3 {offsets = [0, 0], sizes = [16, 8], strides = [1, 1]} : vector<16x32xf32> to vector<16x8xf32>
    %40 = vector.extract_strided_slice %4 {offsets = [0, 0], sizes = [16, 8], strides = [1, 1]} : vector<16x32xf32> to vector<16x8xf32>
    %41 = vector.extract_strided_slice %5 {offsets = [0, 0], sizes = [16, 8], strides = [1, 1]} : vector<16x32xf32> to vector<16x8xf32>
    %cst_11 = arith.constant dense<0.000000e+00> : vector<16x16xf32>
    %42 = tpu.matmul %39, %40, %cst_11 {dimension_numbers = #tpu.dot_dimension_numbers<[1], [1], [0], [0], [0, 0, 1, 0], [], []>} : vector<16x8xf32>, vector<16x8xf32>, vector<16x16xf32> -> vector<16x16xf32>
    %43 = arith.addf %42, %38 : vector<16x16xf32>
    %cst_12 = arith.constant dense<0xFF800000> : vector<16xf32>
    %44 = vector.multi_reduction <maximumf>, %43, %cst_12 [1] : vector<16x16xf32> to vector<16xf32>
    %45 = vector.shape_cast %44 : vector<16xf32> to vector<16x1xf32>
    %46 = vector.broadcast %45 : vector<16x1xf32> to vector<16x16xf32>
    %47 = arith.subf %43, %46 : vector<16x16xf32>
    %48 = math.exp %47 : vector<16x16xf32>
    %cst_13 = arith.constant dense<0.000000e+00> : vector<16xf32>
    %49 = vector.multi_reduction <add>, %48, %cst_13 [1] : vector<16x16xf32> to vector<16xf32>
    %50 = vector.shape_cast %49 : vector<16xf32> to vector<16x1xf32>
    %51 = vector.broadcast %50 : vector<16x1xf32> to vector<16x16xf32>
    %52 = arith.divf %48, %51 : vector<16x16xf32>
    %cst_14 = arith.constant dense<0.000000e+00> : vector<16x8xf32>
    %53 = tpu.matmul %52, %41, %cst_14 {dimension_numbers = #tpu.dot_dimension_numbers<[1], [0], [0], [1], [0, 0, 1, 1], [], []>} : vector<16x16xf32>, vector<16x8xf32>, vector<16x8xf32> -> vector<16x8xf32>
    %c0_15 = arith.constant 0 : index
    %c0_16 = arith.constant 0 : index
    %54 = vector.load %arg5[%c0_15, %c0_16] : memref<16x32xf32, #tpu.memory_space<vmem>>, vector<16x8xf32>
    tpu.vector_store %arg5[%c0_15, %c0_16], %53 {strides = array<i32>} : memref<16x32xf32, #tpu.memory_space<vmem>>, vector<16x8xf32>,
    %55 = vector.extract_strided_slice %3 {offsets = [0, 8], sizes = [16, 8], strides = [1, 1]} : vector<16x32xf32> to vector<16x8xf32>
    %56 = vector.extract_strided_slice %4 {offsets = [0, 8], sizes = [16, 8], strides = [1, 1]} : vector<16x32xf32> to vector<16x8xf32>
    %57 = vector.extract_strided_slice %5 {offsets = [0, 8], sizes = [16, 8], strides = [1, 1]} : vector<16x32xf32> to vector<16x8xf32>
    %cst_17 = arith.constant dense<0.000000e+00> : vector<16x16xf32>
    %58 = tpu.matmul %55, %56, %cst_17 {dimension_numbers = #tpu.dot_dimension_numbers<[1], [1], [0], [0], [0, 0, 1, 0], [], []>} : vector<16x8xf32>, vector<16x8xf32>, vector<16x16xf32> -> vector<16x16xf32>
    %59 = arith.addf %58, %38 : vector<16x16xf32>
    %cst_18 = arith.constant dense<0xFF800000> : vector<16xf32>
    %60 = vector.multi_reduction <maximumf>, %59, %cst_18 [1] : vector<16x16xf32> to vector<16xf32>
    %61 = vector.shape_cast %60 : vector<16xf32> to vector<16x1xf32>
    %62 = vector.broadcast %61 : vector<16x1xf32> to vector<16x16xf32>
    %63 = arith.subf %59, %62 : vector<16x16xf32>
    %64 = math.exp %63 : vector<16x16xf32>
    %cst_19 = arith.constant dense<0.000000e+00> : vector<16xf32>
    %65 = vector.multi_reduction <add>, %64, %cst_19 [1] : vector<16x16xf32> to vector<16xf32>
    %66 = vector.shape_cast %65 : vector<16xf32> to vector<16x1xf32>
    %67 = vector.broadcast %66 : vector<16x1xf32> to vector<16x16xf32>
    %68 = arith.divf %64, %67 : vector<16x16xf32>
    %cst_20 = arith.constant dense<0.000000e+00> : vector<16x8xf32>
    %69 = tpu.matmul %68, %57, %cst_20 {dimension_numbers = #tpu.dot_dimension_numbers<[1], [0], [0], [1], [0, 0, 1, 1], [], []>} : vector<16x16xf32>, vector<16x8xf32>, vector<16x8xf32> -> vector<16x8xf32>
    %c0_21 = arith.constant 0 : index
    %c8 = arith.constant 8 : index
    %70 = vector.load %arg5[%c0_21, %c8] : memref<16x32xf32, #tpu.memory_space<vmem>>, vector<16x8xf32>
    tpu.vector_store %arg5[%c0_21, %c8], %69 {strides = array<i32>} : memref<16x32xf32, #tpu.memory_space<vmem>>, vector<16x8xf32>,
    %71 = vector.extract_strided_slice %3 {offsets = [0, 16], sizes = [16, 8], strides = [1, 1]} : vector<16x32xf32> to vector<16x8xf32>
    %72 = vector.extract_strided_slice %4 {offsets = [0, 16], sizes = [16, 8], strides = [1, 1]} : vector<16x32xf32> to vector<16x8xf32>
    %73 = vector.extract_strided_slice %5 {offsets = [0, 16], sizes = [16, 8], strides = [1, 1]} : vector<16x32xf32> to vector<16x8xf32>
    %cst_22 = arith.constant dense<0.000000e+00> : vector<16x16xf32>
    %74 = tpu.matmul %71, %72, %cst_22 {dimension_numbers = #tpu.dot_dimension_numbers<[1], [1], [0], [0], [0, 0, 1, 0], [], []>} : vector<16x8xf32>, vector<16x8xf32>, vector<16x16xf32> -> vector<16x16xf32>
    %75 = arith.addf %74, %38 : vector<16x16xf32>
    %cst_23 = arith.constant dense<0xFF800000> : vector<16xf32>
    %76 = vector.multi_reduction <maximumf>, %75, %cst_23 [1] : vector<16x16xf32> to vector<16xf32>
    %77 = vector.shape_cast %76 : vector<16xf32> to vector<16x1xf32>
    %78 = vector.broadcast %77 : vector<16x1xf32> to vector<16x16xf32>
    %79 = arith.subf %75, %78 : vector<16x16xf32>
    %80 = math.exp %79 : vector<16x16xf32>
    %cst_24 = arith.constant dense<0.000000e+00> : vector<16xf32>
    %81 = vector.multi_reduction <add>, %80, %cst_24 [1] : vector<16x16xf32> to vector<16xf32>
    %82 = vector.shape_cast %81 : vector<16xf32> to vector<16x1xf32>
    %83 = vector.broadcast %82 : vector<16x1xf32> to vector<16x16xf32>
    %84 = arith.divf %80, %83 : vector<16x16xf32>
    %cst_25 = arith.constant dense<0.000000e+00> : vector<16x8xf32>
    %85 = tpu.matmul %84, %73, %cst_25 {dimension_numbers = #tpu.dot_dimension_numbers<[1], [0], [0], [1], [0, 0, 1, 1], [], []>} : vector<16x16xf32>, vector<16x8xf32>, vector<16x8xf32> -> vector<16x8xf32>
    %c0_26 = arith.constant 0 : index
    %c16 = arith.constant 16 : index
    %86 = vector.load %arg5[%c0_26, %c16] : memref<16x32xf32, #tpu.memory_space<vmem>>, vector<16x8xf32>
    tpu.vector_store %arg5[%c0_26, %c16], %85 {strides = array<i32>} : memref<16x32xf32, #tpu.memory_space<vmem>>, vector<16x8xf32>,
    %87 = vector.extract_strided_slice %3 {offsets = [0, 24], sizes = [16, 8], strides = [1, 1]} : vector<16x32xf32> to vector<16x8xf32>
    %88 = vector.extract_strided_slice %4 {offsets = [0, 24], sizes = [16, 8], strides = [1, 1]} : vector<16x32xf32> to vector<16x8xf32>
    %89 = vector.extract_strided_slice %5 {offsets = [0, 24], sizes = [16, 8], strides = [1, 1]} : vector<16x32xf32> to vector<16x8xf32>
    %cst_27 = arith.constant dense<0.000000e+00> : vector<16x16xf32>
    %90 = tpu.matmul %87, %88, %cst_27 {dimension_numbers = #tpu.dot_dimension_numbers<[1], [1], [0], [0], [0, 0, 1, 0], [], []>} : vector<16x8xf32>, vector<16x8xf32>, vector<16x16xf32> -> vector<16x16xf32>
    %91 = arith.addf %90, %38 : vector<16x16xf32>
    %cst_28 = arith.constant dense<0xFF800000> : vector<16xf32>
    %92 = vector.multi_reduction <maximumf>, %91, %cst_28 [1] : vector<16x16xf32> to vector<16xf32>
    %93 = vector.shape_cast %92 : vector<16xf32> to vector<16x1xf32>
    %94 = vector.broadcast %93 : vector<16x1xf32> to vector<16x16xf32>
    %95 = arith.subf %91, %94 : vector<16x16xf32>
    %96 = math.exp %95 : vector<16x16xf32>
    %cst_29 = arith.constant dense<0.000000e+00> : vector<16xf32>
    %97 = vector.multi_reduction <add>, %96, %cst_29 [1] : vector<16x16xf32> to vector<16xf32>
    %98 = vector.shape_cast %97 : vector<16xf32> to vector<16x1xf32>
    %99 = vector.broadcast %98 : vector<16x1xf32> to vector<16x16xf32>
    %100 = arith.divf %96, %99 : vector<16x16xf32>
    %cst_30 = arith.constant dense<0.000000e+00> : vector<16x8xf32>
    %101 = tpu.matmul %100, %89, %cst_30 {dimension_numbers = #tpu.dot_dimension_numbers<[1], [0], [0], [1], [0, 0, 1, 1], [], []>} : vector<16x16xf32>, vector<16x8xf32>, vector<16x8xf32> -> vector<16x8xf32>
    %c0_31 = arith.constant 0 : index
    %c24 = arith.constant 24 : index
    %102 = vector.load %arg5[%c0_31, %c24] : memref<16x32xf32, #tpu.memory_space<vmem>>, vector<16x8xf32>
    tpu.vector_store %arg5[%c0_31, %c24], %101 {strides = array<i32>} : memref<16x32xf32, #tpu.memory_space<vmem>>, vector<16x8xf32>,
    %c0_32 = arith.constant 0 : index
    %c0_33 = arith.constant 0 : index
    %103 = vector.load %arg5[%c0_32, %c0_33] : memref<16x32xf32, #tpu.memory_space<vmem>>, vector<16x32xf32>
    %c0_34 = arith.constant 0 : index
    %c0_35 = arith.constant 0 : index
    %104 = vector.load %arg2[%c0_34, %c0_35] : memref<32x32xf32, #tpu.memory_space<vmem>>, vector<32x32xf32>
    %cst_36 = arith.constant dense<0.000000e+00> : vector<16x32xf32>
    %105 = tpu.matmul %103, %104, %cst_36 {dimension_numbers = #tpu.dot_dimension_numbers<[1], [0], [0], [1], [0, 0, 1, 1], [], []>} : vector<16x32xf32>, vector<32x32xf32>, vector<16x32xf32> -> vector<16x32xf32>
    %c0_37 = arith.constant 0 : index
    %c0_38 = arith.constant 0 : index
    %106 = vector.load %arg3[%c0_37, %c0_38] : memref<1x32xf32, #tpu.memory_space<vmem>>, vector<1x32xf32>
    %107 = vector.broadcast %106 : vector<1x32xf32> to vector<16x32xf32>
    %108 = arith.addf %105, %107 : vector<16x32xf32>
    %c0_39 = arith.constant 0 : index
    %c0_40 = arith.constant 0 : index
    %109 = vector.load %arg4[%c0_39, %c0_40] : memref<16x32xf32, #tpu.memory_space<vmem>>, vector<16x32xf32>
    tpu.vector_store %arg4[%c0_39, %c0_40], %108 {strides = array<i32>} : memref<16x32xf32, #tpu.memory_space<vmem>>, vector<16x32xf32>,
    return
  }
}

</mosaic_0001>

<llo_original>
// kernel: tpu_custom_call.1
$region0: #{tpu_custom_call.1}
  #allocation0 [shape = 'u32[]', space=smem, size = 0x4, offset = 0x4, fixed_abs, tag = 'smem constant byte address 0x4 - core index']
  #allocation1 [shape = 'u32[144,128]{1,0:T(1,128)}', space=vmem, size = 0x12000, scoped, tag = 'internal scratch']
  #allocation2 [shape = 'f32[16,32]{1,0:T(8,128)}', space=vmem, size = 0x2000, scoped, tag = 'scratch operand']
  %s0 = inlined_call_operand.hbm [shape: f32[16,32], index: 0, kind: input, shape index: {}]
  %s1 = inlined_call_operand.hbm [shape: f32[32,96], index: 1, kind: input, shape index: {}]
  %s2 = inlined_call_operand.hbm [shape: f32[32,32], index: 2, kind: input, shape index: {}]
  %s3 = inlined_call_operand.vmem [shape: f32[1,32], index: 3, kind: input, shape index: {}]
  %s4 = inlined_call_operand.hbm [shape: f32[16,32], index: 4, kind: output, shape index: {}]
  %s5 = sld [smem:[#allocation0]]
  $region38: #{tpu_custom_call.1} parent=0
    _
  %s7 = ssub.s32 1, %s5
  %s8 = scalar_select 0, %s7, %s5
  $region1: #{tpu_custom_call.1} parent=0
    #allocation3 [shape = 'u8[8192]{0}', space=vmem, size = 0x2000, scoped, tag = 'input window, operand 0, single buffered']
    #allocation4 [shape = 's32[1]{0}', space=sflag, size = 0x4, scoped, tag = 'scoped memory for tpu_custom_call.1']
    #allocation5 [shape = 's32[1]{0}', space=sflag, size = 0x4, scoped, tag = 'scoped memory for tpu_custom_call.1']
    #allocation6 [shape = 'u8[16384]{0}', space=vmem, size = 0x4000, scoped, tag = 'input window, operand 1, single buffered']
    #allocation7 [shape = 's32[1]{0}', space=sflag, size = 0x4, scoped, tag = 'scoped memory for tpu_custom_call.1']
    #allocation8 [shape = 'u8[16384]{0}', space=vmem, size = 0x4000, scoped, tag = 'input window, operand 2, single buffered']
    #allocation9 [shape = 'u8[8192]{0}', space=vmem, size = 0x2000, scoped, tag = 'output window, operand 0, single buffered']
    %9 = vsyncpa [#allocation4], 0
    %10 = vsyncpa [#allocation7], 0
    %11 = vsyncpa [#allocation5], 0
    // Predicated region
    $region2: #{tpu_custom_call.1} parent=1 // pred_check
      _
    $region3: #{tpu_custom_call.1} parent=1 // pred_check_branch
      %13 = sbr.rel (0) target = $region5
    $region4: #{tpu_custom_call.1} parent=1 // pred_region
      %s15 = ssub.s32 256, 256
      %16 = vsyncadd [#allocation4], %s15
      %s17 = sshll.u32 [#allocation3], 4
      %s18 = int_to_ptr.vmem [resolvable:$true] %s17
      %23 = dma.hbm_to_vmem [thread:$0]  %s0, 256, %s18, [#allocation4], 128, 128, 8
    $region5: #{tpu_custom_call.1} parent=1 // pred_fallthru
      _
    // Predicated region
    $region6: #{tpu_custom_call.1} parent=1 // pred_check
      _
    $region7: #{tpu_custom_call.1} parent=1 // pred_check_branch
      %25 = sbr.rel (0) target = $region9
    $region8: #{tpu_custom_call.1} parent=1 // pred_region
      %s27 = ssub.s32 512, 512
      %28 = vsyncadd [#allocation7], %s27
      %s29 = sshll.u32 [#allocation6], 4
      %s30 = int_to_ptr.vmem [resolvable:$true] %s29
      %35 = dma.hbm_to_vmem [thread:$0]  %s1, 512, %s30, [#allocation7], 128, 128, 8
    $region9: #{tpu_custom_call.1} parent=1 // pred_fallthru
      _
    // Predicated region
    $region10: #{tpu_custom_call.1} parent=1 // pred_check
      _
    $region11: #{tpu_custom_call.1} parent=1 // pred_check_branch
      %37 = sbr.rel (0) target = $region13
    $region12: #{tpu_custom_call.1} parent=1 // pred_region
      %s39 = ssub.s32 512, 512
      %40 = vsyncadd [#allocation7], %s39
      %s41 = sshll.u32 [#allocation8], 4
      %s42 = int_to_ptr.vmem [resolvable:$true] %s41
      %47 = dma.hbm_to_vmem [thread:$0]  %s2, 512, %s42, [#allocation7], 128, 128, 8
    $region13: #{tpu_custom_call.1} parent=1 // pred_fallthru
      _
    // Predicated region
    $region14: #{tpu_custom_call.1} parent=1 // pred_check
      _
    $region15: #{tpu_custom_call.1} parent=1 // pred_check_branch
      %49 = sbr.rel (0) target = $region17
    $region16: #{tpu_custom_call.1} parent=1 // pred_region
      _
    $region17: #{tpu_custom_call.1} parent=1 // pred_fallthru
      _
    // Predicated region
    $region18: #{tpu_custom_call.1} parent=1 // pred_check
      _
    $region19: #{tpu_custom_call.1} parent=1 // pred_check_branch
      %51 = sbr.rel (0) target = $region21
    $region20: #{tpu_custom_call.1} parent=1 // pred_region
      %52 = dma.done [#allocation4], 256
    $region21: #{tpu_custom_call.1} parent=1 // pred_fallthru
      _
    // Predicated region
    $region22: #{tpu_custom_call.1} parent=1 // pred_check
      _
    $region23: #{tpu_custom_call.1} parent=1 // pred_check_branch
      %54 = sbr.rel (0) target = $region25
    $region24: #{tpu_custom_call.1} parent=1 // pred_region
      %55 = dma.done [#allocation7], 512
    $region25: #{tpu_custom_call.1} parent=1 // pred_fallthru
      _
    // Predicated region
    $region26: #{tpu_custom_call.1} parent=1 // pred_check
      _
    $region27: #{tpu_custom_call.1} parent=1 // pred_check_branch
      %57 = sbr.rel (0) target = $region29
    $region28: #{tpu_custom_call.1} parent=1 // pred_region
      %58 = dma.done [#allocation7], 512
    $region29: #{tpu_custom_call.1} parent=1 // pred_fallthru
      _
    %v59 = vld [vmem:[#allocation3] sm:$0xff]
    %v60 = vld [vmem:[#allocation3 + $0x8] sm:$0xff]
    %v61 = vld [vmem:[#allocation6] sm:$0xff]
    %v62 = vld [vmem:[#allocation6 + $0x8] sm:$0xff]
    %v63 = vld [vmem:[#allocation6 + $0x10] sm:$0xff]
    %v64 = vld [vmem:[#allocation6 + $0x18] sm:$0xff]
    %vm65 = vcmask 261120
    %v67 = vsel %vm65, %v59, 0
    %v70 = vsel %vm65, %v60, 0
    %72 = vmatprep.subr.mxu0 0.0
    %73 = vmatpush1.msra.mxu0 0.0
    %74 = vmatprep.subr.mxu0 0.0
    %75 = vmatpush1.msra.mxu0 0.0
    %76 = vmatprep.subr.mxu0 0.0
    %77 = vmatpush1.msra.mxu0 0.0
    %78 = vmatprep.subr.mxu0 0.0
    %79 = vmatpush1.msra.mxu0 0.0
    %80 = vmatprep.subr.mxu0 0.0
    %81 = vmatpush1.msra.mxu0 0.0
    %82 = vmatprep.subr.mxu0 0.0
    %83 = vmatpush1.msra.mxu0 0.0
    %84 = vmatprep.subr.mxu0 0.0
    %85 = vmatpush1.msra.mxu0 0.0
    %86 = vmatprep.subr.mxu0 0.0
    %87 = vmatpush1.msra.mxu0 0.0
    %88 = vmatprep.subr.mxu0 0.0
    %89 = vmatpush1.msra.mxu0 0.0
    %90 = vmatprep.subr.mxu0 0.0
    %91 = vmatpush1.msra.mxu0 0.0
    %92 = vmatprep.subr.mxu0 0.0
    %93 = vmatpush1.msra.mxu0 0.0
    %94 = vmatprep.subr.mxu0 0.0
    %95 = vmatpush1.msra.mxu0 0.0
    %96 = vmatprep.subr.mxu0 0.0
    %97 = vmatpush1.msra.mxu0 %v64
    %98 = vmatprep.subr.mxu0 0.0
    %99 = vmatpush1.msra.mxu0 %v63
    %100 = vmatprep.subr.mxu0 0.0
    %101 = vmatpush1.msra.mxu0 %v62
    %102 = vmatprep.subr.mxu0 0.0
    %103 = vmatpush1.msra.mxu0 %v61
    %104 = vmatprep.subr.mxu0 0.0
    %105 = vmatpush2.msra.mxu0 0.0
    %106 = vmatprep.subr.mxu0 0.0
    %107 = vmatpush2.msra.mxu0 0.0
    %108 = vmatprep.subr.mxu0 0.0
    %109 = vmatpush2.msra.mxu0 0.0
    %110 = vmatprep.subr.mxu0 0.0
    %111 = vmatpush2.msra.mxu0 0.0
    %112 = vmatprep.subr.mxu0 0.0
    %113 = vmatpush2.msra.mxu0 0.0
    %114 = vmatprep.subr.mxu0 0.0
    %115 = vmatpush2.msra.mxu0 0.0
    %116 = vmatprep.subr.mxu0 0.0
    %117 = vmatpush2.msra.mxu0 0.0
    %118 = vmatprep.subr.mxu0 0.0
    %119 = vmatpush2.msra.mxu0 0.0
    %120 = vmatprep.subr.mxu0 0.0
    %121 = vmatpush2.msra.mxu0 0.0
    %122 = vmatprep.subr.mxu0 0.0
    %123 = vmatpush2.msra.mxu0 0.0
    %124 = vmatprep.subr.mxu0 0.0
    %125 = vmatpush2.msra.mxu0 0.0
    %126 = vmatprep.subr.mxu0 0.0
    %127 = vmatpush2.msra.mxu0 0.0
    %128 = vmatprep.subr.mxu0 0.0
    %129 = vmatpush2.msra.mxu0 0.0
    %130 = vmatprep.subr.mxu0 0.0
    %131 = vmatpush2.msra.mxu0 0.0
    %132 = vmatprep.subr.mxu0 0.0
    %133 = vmatpush2.msra.mxu0 0.0
    %134 = vmatprep.subr.mxu0 0.0
    %135 = vmatpush2.msra.mxu0 0.0
    %136 = vmatprep.mubr.f32.mxu0 0.0
    %137 = vmatmul.mubr.f32.gmra.mxu0 %v67
    %v138 = vpop.f32.mrf.mxu0
    %v139 = vadd.f32 0.0, %v138
    %v140 = vpop.f32.mrf.mxu0
    %141 = vmatprep.mubr.f32.mxu0 0.0
    %142 = vmatmul.mubr.f32.gmra.mxu0 %v70
    %v143 = vpop.f32.mrf.mxu0
    %v144 = vadd.f32 0.0, %v143
    %v145 = vpop.f32.mrf.mxu0
    %146 = vdwg.mxu0
    %v147 = vlaneseq
    %v148 = vshrl.u32 %v147, 7
    %v149 = vadd.s32 %v148, 8
    %v150 = vlaneseq
    %v151 = vand.u32 %v150, 127
    %vm152 = vcmp.lt.s32.totalorder %v148, 0
    %vm153 = vcmp.lt.s32.totalorder %v149, 0
    %vm154 = vcmp.ge.s32.totalorder %v148, 0
    %vm155 = vcmp.ge.s32.totalorder %v149, 0
    %vm156 = vcmp.lt.s32.totalorder %v148, 8
    %vm157 = vcmp.lt.s32.totalorder %v149, 8
    %vm158 = vmand %vm154, %vm156
    %vm159 = vmand %vm155, %vm157
    %vm160 = vcmp.ge.s32.totalorder %v151, 0
    %vm161 = vmand %vm158, %vm160
    %vm162 = vmand %vm159, %vm160
    %vm163 = vcmp.lt.s32.totalorder %v151, 8
    %vm164 = vmand %vm161, %vm163
    %vm165 = vmand %vm162, %vm163
    %vm166 = vmor %vm152, %vm164
    %vm167 = vmor %vm153, %vm165
    %vm168 = vcmp.ge.s32.totalorder %v148, 8
    %vm169 = vcmp.ge.s32.totalorder %v149, 8
    %vm170 = vcmp.lt.s32.totalorder %v148, 16
    %vm171 = vcmp.lt.s32.totalorder %v149, 16
    %vm172 = vmand %vm168, %vm170
    %vm173 = vmand %vm169, %vm171
    %vm174 = vcmp.ge.s32.totalorder %v151, 8
    %vm175 = vmand %vm172, %vm174
    %vm176 = vmand %vm173, %vm174
    %vm177 = vcmp.lt.s32.totalorder %v151, 16
    %vm178 = vmand %vm175, %vm177
    %vm179 = vmand %vm176, %vm177
    %vm180 = vmor %vm166, %vm178
    %vm181 = vmor %vm167, %vm179
    %vm182 = vcmp.le.s32.totalorder %v151, %v148
    %vm183 = vcmp.le.s32.totalorder %v151, %v149
    %vm184 = vmand %vm180, %vm182
    %vm185 = vmand %vm181, %vm183
    %v186 = vsel %vm184, 0.0, -1e+30
    %v187 = vsel %vm185, 0.0, -1e+30
    %190 = vrot.lane.b32.xlu0 %v139, 96
    %v191 = vpop.permute.xlu0 %190
    %192 = vrot.lane.b32.xlu0 %v144, 96
    %v193 = vpop.permute.xlu0 %192
    %vm194 = vcmask 64512
    %v195 = vsel %vm194, %v139, 0
    %v197 = vsel %vm194, %v144, 0
    %v199 = vsel %vm194, %v191, 0
    %v201 = vsel %vm194, %v193, 0
    %203 = vmatprep.subr.mxu0 0.0
    %204 = vmatpush1.xpose.msra.mxu0 0.0
    %205 = vmatprep.subr.mxu0 0.0
    %206 = vmatpush1.xpose.msra.mxu0 0.0
    %207 = vmatprep.subr.mxu0 0.0
    %208 = vmatpush1.xpose.msra.mxu0 0.0
    %209 = vmatprep.subr.mxu0 0.0
    %210 = vmatpush1.xpose.msra.mxu0 0.0
    %211 = vmatprep.subr.mxu0 0.0
    %212 = vmatpush1.xpose.msra.mxu0 0.0
    %213 = vmatprep.subr.mxu0 0.0
    %214 = vmatpush1.xpose.msra.mxu0 0.0
    %215 = vmatprep.subr.mxu0 0.0
    %216 = vmatpush1.xpose.msra.mxu0 0.0
    %217 = vmatprep.subr.mxu0 0.0
    %218 = vmatpush1.xpose.msra.mxu0 0.0
    %219 = vmatprep.subr.mxu0 0.0
    %220 = vmatpush1.xpose.msra.mxu0 0.0
    %221 = vmatprep.subr.mxu0 0.0
    %222 = vmatpush1.xpose.msra.mxu0 0.0
    %223 = vmatprep.subr.mxu0 0.0
    %224 = vmatpush1.xpose.msra.mxu0 0.0
    %225 = vmatprep.subr.mxu0 0.0
    %226 = vmatpush1.xpose.msra.mxu0 0.0
    %227 = vmatprep.subr.mxu0 0.0
    %228 = vmatpush1.xpose.msra.mxu0 0.0
    %229 = vmatprep.subr.mxu0 0.0
    %230 = vmatpush1.xpose.msra.mxu0 0.0
    %231 = vmatprep.subr.mxu0 0.0
    %232 = vmatpush1.xpose.msra.mxu0 %v201
    %233 = vmatprep.subr.mxu0 0.0
    %234 = vmatpush1.xpose.msra.mxu0 %v199
    %235 = vmatprep.subr.mxu0 0.0
    %236 = vmatpush2.xpose.msra.mxu0 0.0
    %237 = vmatprep.subr.mxu0 0.0
    %238 = vmatpush2.xpose.msra.mxu0 0.0
    %239 = vmatprep.subr.mxu0 0.0
    %240 = vmatpush2.xpose.msra.mxu0 0.0
    %241 = vmatprep.subr.mxu0 0.0
    %242 = vmatpush2.xpose.msra.mxu0 0.0
    %243 = vmatprep.subr.mxu0 0.0
    %244 = vmatpush2.xpose.msra.mxu0 0.0
    %245 = vmatprep.subr.mxu0 0.0
    %246 = vmatpush2.xpose.msra.mxu0 0.0
    %247 = vmatprep.subr.mxu0 0.0
    %248 = vmatpush2.xpose.msra.mxu0 0.0
    %249 = vmatprep.subr.mxu0 0.0
    %250 = vmatpush2.xpose.msra.mxu0 0.0
    %251 = vmatprep.subr.mxu0 0.0
    %252 = vmatpush2.xpose.msra.mxu0 0.0
    %253 = vmatprep.subr.mxu0 0.0
    %254 = vmatpush2.xpose.msra.mxu0 0.0
    %255 = vmatprep.subr.mxu0 0.0
    %256 = vmatpush2.xpose.msra.mxu0 0.0
    %257 = vmatprep.subr.mxu0 0.0
    %258 = vmatpush2.xpose.msra.mxu0 0.0
    %259 = vmatprep.subr.mxu0 0.0
    %260 = vmatpush2.xpose.msra.mxu0 0.0
    %261 = vmatprep.subr.mxu0 0.0
    %262 = vmatpush2.xpose.msra.mxu0 0.0
    %263 = vmatprep.subr.mxu0 0.0
    %264 = vmatpush2.xpose.msra.mxu0 0.0
    %265 = vmatprep.subr.mxu0 0.0
    %266 = vmatpush2.xpose.msra.mxu0 0.0
    %267 = vmatprep.mubr.f32.mxu0 0.0
    %268 = vmatmul.mubr.f32.gmra.mxu0 %v195
    %v269 = vpop.f32.mrf.mxu0
    %v270 = vadd.f32 %v186, %v269
    %v271 = vpop.f32.mrf.mxu0
    %272 = vmatprep.mubr.f32.mxu0 0.0
    %273 = vmatmul.mubr.f32.gmra.mxu0 %v197
    %v274 = vpop.f32.mrf.mxu0
    %v275 = vadd.f32 %v187, %v274
    %v276 = vpop.f32.mrf.mxu0
    %277 = vdwg.mxu0
    %vm278 = vcmask 130048
    %v279 = vsel %vm278, %v270, -inf
    %280 = vmax.xlane.f32.xlu0 %v279
    %v281 = vpop.xlane.xlu0 %280
    %v282 = vsel %vm278, %v275, -inf
    %283 = vmax.xlane.f32.xlu0 %v282
    %v284 = vpop.xlane.xlu0 %283
    %v285 = vsub.f32 %v270, %v281
    %v286 = vsub.f32 %v275, %v284
    %v287 = vmul.f32 %v285, 1.442695
    %v288 = vpow.pop %v287
    %v289 = vmul.f32 %v286, 1.442695
    %v290 = vpow.pop %v289
    %v291 = vsel %vm278, %v288, 0.0
    %292 = vadd.xlane.f32.xlu0 %v291
    %v293 = vpop.xlane.xlu0 %292
    %v294 = vsel %vm278, %v290, 0.0
    %295 = vadd.xlane.f32.xlu0 %v294
    %v296 = vpop.xlane.xlu0 %295
    %v297 = vrcp.pop %v293
    %v298 = vmul.f32 %v288, %v297
    %v299 = vrcp.pop %v296
    %v300 = vmul.f32 %v290, %v299
    %301 = vrot.lane.b32.xlu0 %v139, 64
    %v302 = vpop.permute.xlu0 %301
    %303 = vrot.lane.b32.xlu0 %v144, 64
    %v304 = vpop.permute.xlu0 %303
    %v308 = vsel %vm278, %v298, 0
    %v311 = vsel %vm278, %v300, 0
    %313 = vmatprep.subr.mxu0 0.0
    %314 = vmatpush1.msra.mxu0 0.0
    %315 = vmatprep.subr.mxu0 0.0
    %316 = vmatpush1.msra.mxu0 0.0
    %317 = vmatprep.subr.mxu0 0.0
    %318 = vmatpush1.msra.mxu0 0.0
    %319 = vmatprep.subr.mxu0 0.0
    %320 = vmatpush1.msra.mxu0 0.0
    %321 = vmatprep.subr.mxu0 0.0
    %322 = vmatpush1.msra.mxu0 0.0
    %323 = vmatprep.subr.mxu0 0.0
    %324 = vmatpush1.msra.mxu0 0.0
    %325 = vmatprep.subr.mxu0 0.0
    %326 = vmatpush1.msra.mxu0 0.0
    %327 = vmatprep.subr.mxu0 0.0
    %328 = vmatpush1.msra.mxu0 0.0
    %329 = vmatprep.subr.mxu0 0.0
    %330 = vmatpush1.msra.mxu0 0.0
    %331 = vmatprep.subr.mxu0 0.0
    %332 = vmatpush1.msra.mxu0 0.0
    %333 = vmatprep.subr.mxu0 0.0
    %334 = vmatpush1.msra.mxu0 0.0
    %335 = vmatprep.subr.mxu0 0.0
    %336 = vmatpush1.msra.mxu0 0.0
    %337 = vmatprep.subr.mxu0 0.0
    %338 = vmatpush1.msra.mxu0 0.0
    %339 = vmatprep.subr.mxu0 0.0
    %340 = vmatpush1.msra.mxu0 0.0
    %341 = vmatprep.subr.mxu0 0.0
    %342 = vmatpush1.msra.mxu0 %v304
    %343 = vmatprep.subr.mxu0 0.0
    %344 = vmatpush1.msra.mxu0 %v302
    %345 = vmatprep.subr.mxu0 0.0
    %346 = vmatpush2.msra.mxu0 0.0
    %347 = vmatprep.subr.mxu0 0.0
    %348 = vmatpush2.msra.mxu0 0.0
    %349 = vmatprep.subr.mxu0 0.0
    %350 = vmatpush2.msra.mxu0 0.0
    %351 = vmatprep.subr.mxu0 0.0
    %352 = vmatpush2.msra.mxu0 0.0
    %353 = vmatprep.subr.mxu0 0.0
    %354 = vmatpush2.msra.mxu0 0.0
    %355 = vmatprep.subr.mxu0 0.0
    %356 = vmatpush2.msra.mxu0 0.0
    %357 = vmatprep.subr.mxu0 0.0
    %358 = vmatpush2.msra.mxu0 0.0
    %359 = vmatprep.subr.mxu0 0.0
    %360 = vmatpush2.msra.mxu0 0.0
    %361 = vmatprep.subr.mxu0 0.0
    %362 = vmatpush2.msra.mxu0 0.0
    %363 = vmatprep.subr.mxu0 0.0
    %364 = vmatpush2.msra.mxu0 0.0
    %365 = vmatprep.subr.mxu0 0.0
    %366 = vmatpush2.msra.mxu0 0.0
    %367 = vmatprep.subr.mxu0 0.0
    %368 = vmatpush2.msra.mxu0 0.0
    %369 = vmatprep.subr.mxu0 0.0
    %370 = vmatpush2.msra.mxu0 0.0
    %371 = vmatprep.subr.mxu0 0.0
    %372 = vmatpush2.msra.mxu0 0.0
    %373 = vmatprep.subr.mxu0 0.0
    %374 = vmatpush2.msra.mxu0 0.0
    %375 = vmatprep.subr.mxu0 0.0
    %376 = vmatpush2.msra.mxu0 0.0
    %377 = vmatprep.mubr.f32.mxu0 0.0
    %378 = vmatmul.mubr.f32.gmra.mxu0 %v308
    %v379 = vpop.f32.mrf.mxu0
    %v380 = vadd.f32 0.0, %v379
    %v381 = vpop.f32.mrf.mxu0
    %382 = vmatprep.mubr.f32.mxu0 0.0
    %383 = vmatmul.mubr.f32.gmra.mxu0 %v311
    %v384 = vpop.f32.mrf.mxu0
    %v385 = vadd.f32 0.0, %v384
    %v386 = vpop.f32.mrf.mxu0
    %387 = vdwg.mxu0
    %388 = vst.msk [vmem:[#allocation2] sm:$0xff] %vm194, %v380
    %389 = vst.msk [vmem:[#allocation2 + $0x8] sm:$0xff] %vm194, %v385
    %390 = vrot.lane.b32.xlu0 %v139, 120
    %v391 = vpop.permute.xlu0 %390
    %392 = vrot.lane.b32.xlu0 %v144, 120
    %v393 = vpop.permute.xlu0 %392
    %394 = vrot.lane.b32.xlu0 %v139, 88
    %v395 = vpop.permute.xlu0 %394
    %396 = vrot.lane.b32.xlu0 %v144, 88
    %v397 = vpop.permute.xlu0 %396
    %v398 = vsel %vm194, %v391, 0
    %v400 = vsel %vm194, %v393, 0
    %v402 = vsel %vm194, %v395, 0
    %v404 = vsel %vm194, %v397, 0
    %406 = vmatprep.subr.mxu0 0.0
    %407 = vmatpush1.xpose.msra.mxu0 0.0
    %408 = vmatprep.subr.mxu0 0.0
    %409 = vmatpush1.xpose.msra.mxu0 0.0
    %410 = vmatprep.subr.mxu0 0.0
    %411 = vmatpush1.xpose.msra.mxu0 0.0
    %412 = vmatprep.subr.mxu0 0.0
    %413 = vmatpush1.xpose.msra.mxu0 0.0
    %414 = vmatprep.subr.mxu0 0.0
    %415 = vmatpush1.xpose.msra.mxu0 0.0
    %416 = vmatprep.subr.mxu0 0.0
    %417 = vmatpush1.xpose.msra.mxu0 0.0
    %418 = vmatprep.subr.mxu0 0.0
    %419 = vmatpush1.xpose.msra.mxu0 0.0
    %420 = vmatprep.subr.mxu0 0.0
    %421 = vmatpush1.xpose.msra.mxu0 0.0
    %422 = vmatprep.subr.mxu0 0.0
    %423 = vmatpush1.xpose.msra.mxu0 0.0
    %424 = vmatprep.subr.mxu0 0.0
    %425 = vmatpush1.xpose.msra.mxu0 0.0
    %426 = vmatprep.subr.mxu0 0.0
    %427 = vmatpush1.xpose.msra.mxu0 0.0
    %428 = vmatprep.subr.mxu0 0.0
    %429 = vmatpush1.xpose.msra.mxu0 0.0
    %430 = vmatprep.subr.mxu0 0.0
    %431 = vmatpush1.xpose.msra.mxu0 0.0
    %432 = vmatprep.subr.mxu0 0.0
    %433 = vmatpush1.xpose.msra.mxu0 0.0
    %434 = vmatprep.subr.mxu0 0.0
    %435 = vmatpush1.xpose.msra.mxu0 %v404
    %436 = vmatprep.subr.mxu0 0.0
    %437 = vmatpush1.xpose.msra.mxu0 %v402
    %438 = vmatprep.subr.mxu0 0.0
    %439 = vmatpush2.xpose.msra.mxu0 0.0
    %440 = vmatprep.subr.mxu0 0.0
    %441 = vmatpush2.xpose.msra.mxu0 0.0
    %442 = vmatprep.subr.mxu0 0.0
    %443 = vmatpush2.xpose.msra.mxu0 0.0
    %444 = vmatprep.subr.mxu0 0.0
    %445 = vmatpush2.xpose.msra.mxu0 0.0
    %446 = vmatprep.subr.mxu0 0.0
    %447 = vmatpush2.xpose.msra.mxu0 0.0
    %448 = vmatprep.subr.mxu0 0.0
    %449 = vmatpush2.xpose.msra.mxu0 0.0
    %450 = vmatprep.subr.mxu0 0.0
    %451 = vmatpush2.xpose.msra.mxu0 0.0
    %452 = vmatprep.subr.mxu0 0.0
    %453 = vmatpush2.xpose.msra.mxu0 0.0
    %454 = vmatprep.subr.mxu0 0.0
    %455 = vmatpush2.xpose.msra.mxu0 0.0
    %456 = vmatprep.subr.mxu0 0.0
    %457 = vmatpush2.xpose.msra.mxu0 0.0
    %458 = vmatprep.subr.mxu0 0.0
    %459 = vmatpush2.xpose.msra.mxu0 0.0
    %460 = vmatprep.subr.mxu0 0.0
    %461 = vmatpush2.xpose.msra.mxu0 0.0
    %462 = vmatprep.subr.mxu0 0.0
    %463 = vmatpush2.xpose.msra.mxu0 0.0
    %464 = vmatprep.subr.mxu0 0.0
    %465 = vmatpush2.xpose.msra.mxu0 0.0
    %466 = vmatprep.subr.mxu0 0.0
    %467 = vmatpush2.xpose.msra.mxu0 0.0
    %468 = vmatprep.subr.mxu0 0.0
    %469 = vmatpush2.xpose.msra.mxu0 0.0
    %470 = vmatprep.mubr.f32.mxu0 0.0
    %471 = vmatmul.mubr.f32.gmra.mxu0 %v398
    %v472 = vpop.f32.mrf.mxu0
    %v473 = vadd.f32 %v186, %v472
    %v474 = vpop.f32.mrf.mxu0
    %475 = vmatprep.mubr.f32.mxu0 0.0
    %476 = vmatmul.mubr.f32.gmra.mxu0 %v400
    %v477 = vpop.f32.mrf.mxu0
    %v478 = vadd.f32 %v187, %v477
    %v479 = vpop.f32.mrf.mxu0
    %480 = vdwg.mxu0
    %v481 = vsel %vm278, %v473, -inf
    %482 = vmax.xlane.f32.xlu0 %v481
    %v483 = vpop.xlane.xlu0 %482
    %v484 = vsel %vm278, %v478, -inf
    %485 = vmax.xlane.f32.xlu0 %v484
    %v486 = vpop.xlane.xlu0 %485
    %v487 = vsub.f32 %v473, %v483
    %v488 = vsub.f32 %v478, %v486
    %v489 = vmul.f32 %v487, 1.442695
    %v490 = vpow.pop %v489
    %v491 = vmul.f32 %v488, 1.442695
    %v492 = vpow.pop %v491
    %v493 = vsel %vm278, %v490, 0.0
    %494 = vadd.xlane.f32.xlu0 %v493
    %v495 = vpop.xlane.xlu0 %494
    %v496 = vsel %vm278, %v492, 0.0
    %497 = vadd.xlane.f32.xlu0 %v496
    %v498 = vpop.xlane.xlu0 %497
    %v499 = vrcp.pop %v495
    %v500 = vmul.f32 %v490, %v499
    %v501 = vrcp.pop %v498
    %v502 = vmul.f32 %v492, %v501
    %503 = vrot.lane.b32.xlu0 %v139, 56
    %v504 = vpop.permute.xlu0 %503
    %505 = vrot.lane.b32.xlu0 %v144, 56
    %v506 = vpop.permute.xlu0 %505
    %v510 = vsel %vm278, %v500, 0
    %v513 = vsel %vm278, %v502, 0
    %515 = vmatprep.subr.mxu0 0.0
    %516 = vmatpush1.msra.mxu0 0.0
    %517 = vmatprep.subr.mxu0 0.0
    %518 = vmatpush1.msra.mxu0 0.0
    %519 = vmatprep.subr.mxu0 0.0
    %520 = vmatpush1.msra.mxu0 0.0
    %521 = vmatprep.subr.mxu0 0.0
    %522 = vmatpush1.msra.mxu0 0.0
    %523 = vmatprep.subr.mxu0 0.0
    %524 = vmatpush1.msra.mxu0 0.0
    %525 = vmatprep.subr.mxu0 0.0
    %526 = vmatpush1.msra.mxu0 0.0
    %527 = vmatprep.subr.mxu0 0.0
    %528 = vmatpush1.msra.mxu0 0.0
    %529 = vmatprep.subr.mxu0 0.0
    %530 = vmatpush1.msra.mxu0 0.0
    %531 = vmatprep.subr.mxu0 0.0
    %532 = vmatpush1.msra.mxu0 0.0
    %533 = vmatprep.subr.mxu0 0.0
    %534 = vmatpush1.msra.mxu0 0.0
    %535 = vmatprep.subr.mxu0 0.0
    %536 = vmatpush1.msra.mxu0 0.0
    %537 = vmatprep.subr.mxu0 0.0
    %538 = vmatpush1.msra.mxu0 0.0
    %539 = vmatprep.subr.mxu0 0.0
    %540 = vmatpush1.msra.mxu0 0.0
    %541 = vmatprep.subr.mxu0 0.0
    %542 = vmatpush1.msra.mxu0 0.0
    %543 = vmatprep.subr.mxu0 0.0
    %544 = vmatpush1.msra.mxu0 %v506
    %545 = vmatprep.subr.mxu0 0.0
    %546 = vmatpush1.msra.mxu0 %v504
    %547 = vmatprep.subr.mxu0 0.0
    %548 = vmatpush2.msra.mxu0 0.0
    %549 = vmatprep.subr.mxu0 0.0
    %550 = vmatpush2.msra.mxu0 0.0
    %551 = vmatprep.subr.mxu0 0.0
    %552 = vmatpush2.msra.mxu0 0.0
    %553 = vmatprep.subr.mxu0 0.0
    %554 = vmatpush2.msra.mxu0 0.0
    %555 = vmatprep.subr.mxu0 0.0
    %556 = vmatpush2.msra.mxu0 0.0
    %557 = vmatprep.subr.mxu0 0.0
    %558 = vmatpush2.msra.mxu0 0.0
    %559 = vmatprep.subr.mxu0 0.0
    %560 = vmatpush2.msra.mxu0 0.0
    %561 = vmatprep.subr.mxu0 0.0
    %562 = vmatpush2.msra.mxu0 0.0
    %563 = vmatprep.subr.mxu0 0.0
    %564 = vmatpush2.msra.mxu0 0.0
    %565 = vmatprep.subr.mxu0 0.0
    %566 = vmatpush2.msra.mxu0 0.0
    %567 = vmatprep.subr.mxu0 0.0
    %568 = vmatpush2.msra.mxu0 0.0
    %569 = vmatprep.subr.mxu0 0.0
    %570 = vmatpush2.msra.mxu0 0.0
    %571 = vmatprep.subr.mxu0 0.0
    %572 = vmatpush2.msra.mxu0 0.0
    %573 = vmatprep.subr.mxu0 0.0
    %574 = vmatpush2.msra.mxu0 0.0
    %575 = vmatprep.subr.mxu0 0.0
    %576 = vmatpush2.msra.mxu0 0.0
    %577 = vmatprep.subr.mxu0 0.0
    %578 = vmatpush2.msra.mxu0 0.0
    %579 = vmatprep.mubr.f32.mxu0 0.0
    %580 = vmatmul.mubr.f32.gmra.mxu0 %v510
    %v581 = vpop.f32.mrf.mxu0
    %v582 = vadd.f32 0.0, %v581
    %v583 = vpop.f32.mrf.mxu0
    %584 = vmatprep.mubr.f32.mxu0 0.0
    %585 = vmatmul.mubr.f32.gmra.mxu0 %v513
    %v586 = vpop.f32.mrf.mxu0
    %v587 = vadd.f32 0.0, %v586
    %v588 = vpop.f32.mrf.mxu0
    %589 = vdwg.mxu0
    %592 = vrot.lane.b32.xlu0 %v582, 8
    %v593 = vpop.permute.xlu0 %592
    %594 = vrot.lane.b32.xlu0 %v587, 8
    %v595 = vpop.permute.xlu0 %594
    %vm598 = vcmask 130112
    %599 = vst.msk [vmem:[#allocation2] sm:$0xff] %vm598, %v593
    %600 = vst.msk [vmem:[#allocation2 + $0x8] sm:$0xff] %vm598, %v595
    %601 = vrot.lane.b32.xlu0 %v139, 112
    %v602 = vpop.permute.xlu0 %601
    %603 = vrot.lane.b32.xlu0 %v144, 112
    %v604 = vpop.permute.xlu0 %603
    %605 = vrot.lane.b32.xlu0 %v139, 80
    %v606 = vpop.permute.xlu0 %605
    %607 = vrot.lane.b32.xlu0 %v144, 80
    %v608 = vpop.permute.xlu0 %607
    %v609 = vsel %vm194, %v602, 0
    %v611 = vsel %vm194, %v604, 0
    %v613 = vsel %vm194, %v606, 0
    %v615 = vsel %vm194, %v608, 0
    %617 = vmatprep.subr.mxu0 0.0
    %618 = vmatpush1.xpose.msra.mxu0 0.0
    %619 = vmatprep.subr.mxu0 0.0
    %620 = vmatpush1.xpose.msra.mxu0 0.0
    %621 = vmatprep.subr.mxu0 0.0
    %622 = vmatpush1.xpose.msra.mxu0 0.0
    %623 = vmatprep.subr.mxu0 0.0
    %624 = vmatpush1.xpose.msra.mxu0 0.0
    %625 = vmatprep.subr.mxu0 0.0
    %626 = vmatpush1.xpose.msra.mxu0 0.0
    %627 = vmatprep.subr.mxu0 0.0
    %628 = vmatpush1.xpose.msra.mxu0 0.0
    %629 = vmatprep.subr.mxu0 0.0
    %630 = vmatpush1.xpose.msra.mxu0 0.0
    %631 = vmatprep.subr.mxu0 0.0
    %632 = vmatpush1.xpose.msra.mxu0 0.0
    %633 = vmatprep.subr.mxu0 0.0
    %634 = vmatpush1.xpose.msra.mxu0 0.0
    %635 = vmatprep.subr.mxu0 0.0
    %636 = vmatpush1.xpose.msra.mxu0 0.0
    %637 = vmatprep.subr.mxu0 0.0
    %638 = vmatpush1.xpose.msra.mxu0 0.0
    %639 = vmatprep.subr.mxu0 0.0
    %640 = vmatpush1.xpose.msra.mxu0 0.0
    %641 = vmatprep.subr.mxu0 0.0
    %642 = vmatpush1.xpose.msra.mxu0 0.0
    %643 = vmatprep.subr.mxu0 0.0
    %644 = vmatpush1.xpose.msra.mxu0 0.0
    %645 = vmatprep.subr.mxu0 0.0
    %646 = vmatpush1.xpose.msra.mxu0 %v615
    %647 = vmatprep.subr.mxu0 0.0
    %648 = vmatpush1.xpose.msra.mxu0 %v613
    %649 = vmatprep.subr.mxu0 0.0
    %650 = vmatpush2.xpose.msra.mxu0 0.0
    %651 = vmatprep.subr.mxu0 0.0
    %652 = vmatpush2.xpose.msra.mxu0 0.0
    %653 = vmatprep.subr.mxu0 0.0
    %654 = vmatpush2.xpose.msra.mxu0 0.0
    %655 = vmatprep.subr.mxu0 0.0
    %656 = vmatpush2.xpose.msra.mxu0 0.0
    %657 = vmatprep.subr.mxu0 0.0
    %658 = vmatpush2.xpose.msra.mxu0 0.0
    %659 = vmatprep.subr.mxu0 0.0
    %660 = vmatpush2.xpose.msra.mxu0 0.0
    %661 = vmatprep.subr.mxu0 0.0
    %662 = vmatpush2.xpose.msra.mxu0 0.0
    %663 = vmatprep.subr.mxu0 0.0
    %664 = vmatpush2.xpose.msra.mxu0 0.0
    %665 = vmatprep.subr.mxu0 0.0
    %666 = vmatpush2.xpose.msra.mxu0 0.0
    %667 = vmatprep.subr.mxu0 0.0
    %668 = vmatpush2.xpose.msra.mxu0 0.0
    %669 = vmatprep.subr.mxu0 0.0
    %670 = vmatpush2.xpose.msra.mxu0 0.0
    %671 = vmatprep.subr.mxu0 0.0
    %672 = vmatpush2.xpose.msra.mxu0 0.0
    %673 = vmatprep.subr.mxu0 0.0
    %674 = vmatpush2.xpose.msra.mxu0 0.0
    %675 = vmatprep.subr.mxu0 0.0
    %676 = vmatpush2.xpose.msra.mxu0 0.0
    %677 = vmatprep.subr.mxu0 0.0
    %678 = vmatpush2.xpose.msra.mxu0 0.0
    %679 = vmatprep.subr.mxu0 0.0
    %680 = vmatpush2.xpose.msra.mxu0 0.0
    %681 = vmatprep.mubr.f32.mxu0 0.0
    %682 = vmatmul.mubr.f32.gmra.mxu0 %v609
    %v683 = vpop.f32.mrf.mxu0
    %v684 = vadd.f32 %v186, %v683
    %v685 = vpop.f32.mrf.mxu0
    %686 = vmatprep.mubr.f32.mxu0 0.0
    %687 = vmatmul.mubr.f32.gmra.mxu0 %v611
    %v688 = vpop.f32.mrf.mxu0
    %v689 = vadd.f32 %v187, %v688
    %v690 = vpop.f32.mrf.mxu0
    %691 = vdwg.mxu0
    %v692 = vsel %vm278, %v684, -inf
    %693 = vmax.xlane.f32.xlu0 %v692
    %v694 = vpop.xlane.xlu0 %693
    %v695 = vsel %vm278, %v689, -inf
    %696 = vmax.xlane.f32.xlu0 %v695
    %v697 = vpop.xlane.xlu0 %696
    %v698 = vsub.f32 %v684, %v694
    %v699 = vsub.f32 %v689, %v697
    %v700 = vmul.f32 %v698, 1.442695
    %v701 = vpow.pop %v700
    %v702 = vmul.f32 %v699, 1.442695
    %v703 = vpow.pop %v702
    %v704 = vsel %vm278, %v701, 0.0
    %705 = vadd.xlane.f32.xlu0 %v704
    %v706 = vpop.xlane.xlu0 %705
    %v707 = vsel %vm278, %v703, 0.0
    %708 = vadd.xlane.f32.xlu0 %v707
    %v709 = vpop.xlane.xlu0 %708
    %v710 = vrcp.pop %v706
    %v711 = vmul.f32 %v701, %v710
    %v712 = vrcp.pop %v709
    %v713 = vmul.f32 %v703, %v712
    %714 = vrot.lane.b32.xlu0 %v139, 48
    %v715 = vpop.permute.xlu0 %714
    %716 = vrot.lane.b32.xlu0 %v144, 48
    %v717 = vpop.permute.xlu0 %716
    %v721 = vsel %vm278, %v711, 0
    %v724 = vsel %vm278, %v713, 0
    %726 = vmatprep.subr.mxu0 0.0
    %727 = vmatpush1.msra.mxu0 0.0
    %728 = vmatprep.subr.mxu0 0.0
    %729 = vmatpush1.msra.mxu0 0.0
    %730 = vmatprep.subr.mxu0 0.0
    %731 = vmatpush1.msra.mxu0 0.0
    %732 = vmatprep.subr.mxu0 0.0
    %733 = vmatpush1.msra.mxu0 0.0
    %734 = vmatprep.subr.mxu0 0.0
    %735 = vmatpush1.msra.mxu0 0.0
    %736 = vmatprep.subr.mxu0 0.0
    %737 = vmatpush1.msra.mxu0 0.0
    %738 = vmatprep.subr.mxu0 0.0
    %739 = vmatpush1.msra.mxu0 0.0
    %740 = vmatprep.subr.mxu0 0.0
    %741 = vmatpush1.msra.mxu0 0.0
    %742 = vmatprep.subr.mxu0 0.0
    %743 = vmatpush1.msra.mxu0 0.0
    %744 = vmatprep.subr.mxu0 0.0
    %745 = vmatpush1.msra.mxu0 0.0
    %746 = vmatprep.subr.mxu0 0.0
    %747 = vmatpush1.msra.mxu0 0.0
    %748 = vmatprep.subr.mxu0 0.0
    %749 = vmatpush1.msra.mxu0 0.0
    %750 = vmatprep.subr.mxu0 0.0
    %751 = vmatpush1.msra.mxu0 0.0
    %752 = vmatprep.subr.mxu0 0.0
    %753 = vmatpush1.msra.mxu0 0.0
    %754 = vmatprep.subr.mxu0 0.0
    %755 = vmatpush1.msra.mxu0 %v717
    %756 = vmatprep.subr.mxu0 0.0
    %757 = vmatpush1.msra.mxu0 %v715
    %758 = vmatprep.subr.mxu0 0.0
    %759 = vmatpush2.msra.mxu0 0.0
    %760 = vmatprep.subr.mxu0 0.0
    %761 = vmatpush2.msra.mxu0 0.0
    %762 = vmatprep.subr.mxu0 0.0
    %763 = vmatpush2.msra.mxu0 0.0
    %764 = vmatprep.subr.mxu0 0.0
    %765 = vmatpush2.msra.mxu0 0.0
    %766 = vmatprep.subr.mxu0 0.0
    %767 = vmatpush2.msra.mxu0 0.0
    %768 = vmatprep.subr.mxu0 0.0
    %769 = vmatpush2.msra.mxu0 0.0
    %770 = vmatprep.subr.mxu0 0.0
    %771 = vmatpush2.msra.mxu0 0.0
    %772 = vmatprep.subr.mxu0 0.0
    %773 = vmatpush2.msra.mxu0 0.0
    %774 = vmatprep.subr.mxu0 0.0
    %775 = vmatpush2.msra.mxu0 0.0
    %776 = vmatprep.subr.mxu0 0.0
    %777 = vmatpush2.msra.mxu0 0.0
    %778 = vmatprep.subr.mxu0 0.0
    %779 = vmatpush2.msra.mxu0 0.0
    %780 = vmatprep.subr.mxu0 0.0
    %781 = vmatpush2.msra.mxu0 0.0
    %782 = vmatprep.subr.mxu0 0.0
    %783 = vmatpush2.msra.mxu0 0.0
    %784 = vmatprep.subr.mxu0 0.0
    %785 = vmatpush2.msra.mxu0 0.0
    %786 = vmatprep.subr.mxu0 0.0
    %787 = vmatpush2.msra.mxu0 0.0
    %788 = vmatprep.subr.mxu0 0.0
    %789 = vmatpush2.msra.mxu0 0.0
    %790 = vmatprep.mubr.f32.mxu0 0.0
    %791 = vmatmul.mubr.f32.gmra.mxu0 %v721
    %v792 = vpop.f32.mrf.mxu0
    %v793 = vadd.f32 0.0, %v792
    %v794 = vpop.f32.mrf.mxu0
    %795 = vmatprep.mubr.f32.mxu0 0.0
    %796 = vmatmul.mubr.f32.gmra.mxu0 %v724
    %v797 = vpop.f32.mrf.mxu0
    %v798 = vadd.f32 0.0, %v797
    %v799 = vpop.f32.mrf.mxu0
    %800 = vdwg.mxu0
    %803 = vrot.lane.b32.xlu0 %v793, 16
    %v804 = vpop.permute.xlu0 %803
    %805 = vrot.lane.b32.xlu0 %v798, 16
    %v806 = vpop.permute.xlu0 %805
    %vm809 = vcmask 195712
    %810 = vst.msk [vmem:[#allocation2] sm:$0xff] %vm809, %v804
    %811 = vst.msk [vmem:[#allocation2 + $0x8] sm:$0xff] %vm809, %v806
    %812 = vrot.lane.b32.xlu0 %v139, 104
    %v813 = vpop.permute.xlu0 %812
    %814 = vrot.lane.b32.xlu0 %v144, 104
    %v815 = vpop.permute.xlu0 %814
    %816 = vrot.lane.b32.xlu0 %v139, 72
    %v817 = vpop.permute.xlu0 %816
    %818 = vrot.lane.b32.xlu0 %v144, 72
    %v819 = vpop.permute.xlu0 %818
    %v820 = vsel %vm194, %v813, 0
    %v822 = vsel %vm194, %v815, 0
    %v824 = vsel %vm194, %v817, 0
    %v826 = vsel %vm194, %v819, 0
    %828 = vmatprep.subr.mxu0 0.0
    %829 = vmatpush1.xpose.msra.mxu0 0.0
    %830 = vmatprep.subr.mxu0 0.0
    %831 = vmatpush1.xpose.msra.mxu0 0.0
    %832 = vmatprep.subr.mxu0 0.0
    %833 = vmatpush1.xpose.msra.mxu0 0.0
    %834 = vmatprep.subr.mxu0 0.0
    %835 = vmatpush1.xpose.msra.mxu0 0.0
    %836 = vmatprep.subr.mxu0 0.0
    %837 = vmatpush1.xpose.msra.mxu0 0.0
    %838 = vmatprep.subr.mxu0 0.0
    %839 = vmatpush1.xpose.msra.mxu0 0.0
    %840 = vmatprep.subr.mxu0 0.0
    %841 = vmatpush1.xpose.msra.mxu0 0.0
    %842 = vmatprep.subr.mxu0 0.0
    %843 = vmatpush1.xpose.msra.mxu0 0.0
    %844 = vmatprep.subr.mxu0 0.0
    %845 = vmatpush1.xpose.msra.mxu0 0.0
    %846 = vmatprep.subr.mxu0 0.0
    %847 = vmatpush1.xpose.msra.mxu0 0.0
    %848 = vmatprep.subr.mxu0 0.0
    %849 = vmatpush1.xpose.msra.mxu0 0.0
    %850 = vmatprep.subr.mxu0 0.0
    %851 = vmatpush1.xpose.msra.mxu0 0.0
    %852 = vmatprep.subr.mxu0 0.0
    %853 = vmatpush1.xpose.msra.mxu0 0.0
    %854 = vmatprep.subr.mxu0 0.0
    %855 = vmatpush1.xpose.msra.mxu0 0.0
    %856 = vmatprep.subr.mxu0 0.0
    %857 = vmatpush1.xpose.msra.mxu0 %v826
    %858 = vmatprep.subr.mxu0 0.0
    %859 = vmatpush1.xpose.msra.mxu0 %v824
    %860 = vmatprep.subr.mxu0 0.0
    %861 = vmatpush2.xpose.msra.mxu0 0.0
    %862 = vmatprep.subr.mxu0 0.0
    %863 = vmatpush2.xpose.msra.mxu0 0.0
    %864 = vmatprep.subr.mxu0 0.0
    %865 = vmatpush2.xpose.msra.mxu0 0.0
    %866 = vmatprep.subr.mxu0 0.0
    %867 = vmatpush2.xpose.msra.mxu0 0.0
    %868 = vmatprep.subr.mxu0 0.0
    %869 = vmatpush2.xpose.msra.mxu0 0.0
    %870 = vmatprep.subr.mxu0 0.0
    %871 = vmatpush2.xpose.msra.mxu0 0.0
    %872 = vmatprep.subr.mxu0 0.0
    %873 = vmatpush2.xpose.msra.mxu0 0.0
    %874 = vmatprep.subr.mxu0 0.0
    %875 = vmatpush2.xpose.msra.mxu0 0.0
    %876 = vmatprep.subr.mxu0 0.0
    %877 = vmatpush2.xpose.msra.mxu0 0.0
    %878 = vmatprep.subr.mxu0 0.0
    %879 = vmatpush2.xpose.msra.mxu0 0.0
    %880 = vmatprep.subr.mxu0 0.0
    %881 = vmatpush2.xpose.msra.mxu0 0.0
    %882 = vmatprep.subr.mxu0 0.0
    %883 = vmatpush2.xpose.msra.mxu0 0.0
    %884 = vmatprep.subr.mxu0 0.0
    %885 = vmatpush2.xpose.msra.mxu0 0.0
    %886 = vmatprep.subr.mxu0 0.0
    %887 = vmatpush2.xpose.msra.mxu0 0.0
    %888 = vmatprep.subr.mxu0 0.0
    %889 = vmatpush2.xpose.msra.mxu0 0.0
    %890 = vmatprep.subr.mxu0 0.0
    %891 = vmatpush2.xpose.msra.mxu0 0.0
    %892 = vmatprep.mubr.f32.mxu0 0.0
    %893 = vmatmul.mubr.f32.gmra.mxu0 %v820
    %v894 = vpop.f32.mrf.mxu0
    %v895 = vadd.f32 %v186, %v894
    %v896 = vpop.f32.mrf.mxu0
    %897 = vmatprep.mubr.f32.mxu0 0.0
    %898 = vmatmul.mubr.f32.gmra.mxu0 %v822
    %v899 = vpop.f32.mrf.mxu0
    %v900 = vadd.f32 %v187, %v899
    %v901 = vpop.f32.mrf.mxu0
    %902 = vdwg.mxu0
    %v903 = vsel %vm278, %v895, -inf
    %904 = vmax.xlane.f32.xlu0 %v903
    %v905 = vpop.xlane.xlu0 %904
    %v906 = vsel %vm278, %v900, -inf
    %907 = vmax.xlane.f32.xlu0 %v906
    %v908 = vpop.xlane.xlu0 %907
    %v909 = vsub.f32 %v895, %v905
    %v910 = vsub.f32 %v900, %v908
    %v911 = vmul.f32 %v909, 1.442695
    %v912 = vpow.pop %v911
    %v913 = vmul.f32 %v910, 1.442695
    %v914 = vpow.pop %v913
    %v915 = vsel %vm278, %v912, 0.0
    %916 = vadd.xlane.f32.xlu0 %v915
    %v917 = vpop.xlane.xlu0 %916
    %v918 = vsel %vm278, %v914, 0.0
    %919 = vadd.xlane.f32.xlu0 %v918
    %v920 = vpop.xlane.xlu0 %919
    %v921 = vrcp.pop %v917
    %v922 = vmul.f32 %v912, %v921
    %v923 = vrcp.pop %v920
    %v924 = vmul.f32 %v914, %v923
    %925 = vrot.lane.b32.xlu0 %v139, 40
    %v926 = vpop.permute.xlu0 %925
    %927 = vrot.lane.b32.xlu0 %v144, 40
    %v928 = vpop.permute.xlu0 %927
    %v932 = vsel %vm278, %v922, 0
    %v935 = vsel %vm278, %v924, 0
    %937 = vmatprep.subr.mxu0 0.0
    %938 = vmatpush1.msra.mxu0 0.0
    %939 = vmatprep.subr.mxu0 0.0
    %940 = vmatpush1.msra.mxu0 0.0
    %941 = vmatprep.subr.mxu0 0.0
    %942 = vmatpush1.msra.mxu0 0.0
    %943 = vmatprep.subr.mxu0 0.0
    %944 = vmatpush1.msra.mxu0 0.0
    %945 = vmatprep.subr.mxu0 0.0
    %946 = vmatpush1.msra.mxu0 0.0
    %947 = vmatprep.subr.mxu0 0.0
    %948 = vmatpush1.msra.mxu0 0.0
    %949 = vmatprep.subr.mxu0 0.0
    %950 = vmatpush1.msra.mxu0 0.0
    %951 = vmatprep.subr.mxu0 0.0
    %952 = vmatpush1.msra.mxu0 0.0
    %953 = vmatprep.subr.mxu0 0.0
    %954 = vmatpush1.msra.mxu0 0.0
    %955 = vmatprep.subr.mxu0 0.0
    %956 = vmatpush1.msra.mxu0 0.0
    %957 = vmatprep.subr.mxu0 0.0
    %958 = vmatpush1.msra.mxu0 0.0
    %959 = vmatprep.subr.mxu0 0.0
    %960 = vmatpush1.msra.mxu0 0.0
    %961 = vmatprep.subr.mxu0 0.0
    %962 = vmatpush1.msra.mxu0 0.0
    %963 = vmatprep.subr.mxu0 0.0
    %964 = vmatpush1.msra.mxu0 0.0
    %965 = vmatprep.subr.mxu0 0.0
    %966 = vmatpush1.msra.mxu0 %v928
    %967 = vmatprep.subr.mxu0 0.0
    %968 = vmatpush1.msra.mxu0 %v926
    %969 = vmatprep.subr.mxu0 0.0
    %970 = vmatpush2.msra.mxu0 0.0
    %971 = vmatprep.subr.mxu0 0.0
    %972 = vmatpush2.msra.mxu0 0.0
    %973 = vmatprep.subr.mxu0 0.0
    %974 = vmatpush2.msra.mxu0 0.0
    %975 = vmatprep.subr.mxu0 0.0
    %976 = vmatpush2.msra.mxu0 0.0
    %977 = vmatprep.subr.mxu0 0.0
    %978 = vmatpush2.msra.mxu0 0.0
    %979 = vmatprep.subr.mxu0 0.0
    %980 = vmatpush2.msra.mxu0 0.0
    %981 = vmatprep.subr.mxu0 0.0
    %982 = vmatpush2.msra.mxu0 0.0
    %983 = vmatprep.subr.mxu0 0.0
    %984 = vmatpush2.msra.mxu0 0.0
    %985 = vmatprep.subr.mxu0 0.0
    %986 = vmatpush2.msra.mxu0 0.0
    %987 = vmatprep.subr.mxu0 0.0
    %988 = vmatpush2.msra.mxu0 0.0
    %989 = vmatprep.subr.mxu0 0.0
    %990 = vmatpush2.msra.mxu0 0.0
    %991 = vmatprep.subr.mxu0 0.0
    %992 = vmatpush2.msra.mxu0 0.0
    %993 = vmatprep.subr.mxu0 0.0
    %994 = vmatpush2.msra.mxu0 0.0
    %995 = vmatprep.subr.mxu0 0.0
    %996 = vmatpush2.msra.mxu0 0.0
    %997 = vmatprep.subr.mxu0 0.0
    %998 = vmatpush2.msra.mxu0 0.0
    %999 = vmatprep.subr.mxu0 0.0
    %1000 = vmatpush2.msra.mxu0 0.0
    %1001 = vmatprep.mubr.f32.mxu0 0.0
    %1002 = vmatmul.mubr.f32.gmra.mxu0 %v932
    %v1003 = vpop.f32.mrf.mxu0
    %v1004 = vadd.f32 0.0, %v1003
    %v1005 = vpop.f32.mrf.mxu0
    %1006 = vmatprep.mubr.f32.mxu0 0.0
    %1007 = vmatmul.mubr.f32.gmra.mxu0 %v935
    %v1008 = vpop.f32.mrf.mxu0
    %v1009 = vadd.f32 0.0, %v1008
    %v1010 = vpop.f32.mrf.mxu0
    %1011 = vdwg.mxu0
    %1014 = vrot.lane.b32.xlu0 %v1004, 24
    %v1015 = vpop.permute.xlu0 %1014
    %1016 = vrot.lane.b32.xlu0 %v1009, 24
    %v1017 = vpop.permute.xlu0 %1016
    %vm1020 = vcmask 261312
    %1021 = vst.msk [vmem:[#allocation2] sm:$0xff] %vm1020, %v1015
    %1022 = vst.msk [vmem:[#allocation2 + $0x8] sm:$0xff] %vm1020, %v1017
    %v1023 = vld [vmem:[#allocation2] sm:$0xff]
    %v1024 = vld [vmem:[#allocation2 + $0x8] sm:$0xff]
    %v1025 = vld [vmem:[#allocation8] sm:$0xff]
    %v1026 = vld [vmem:[#allocation8 + $0x8] sm:$0xff]
    %v1027 = vld [vmem:[#allocation8 + $0x10] sm:$0xff]
    %v1028 = vld [vmem:[#allocation8 + $0x18] sm:$0xff]
    %v1029 = vld [vmem:[%s3] sm:$0x1]
    %v1031 = vlaneseq
    %v1032 = vshrl.u32 %v1031, 7
    %v1033 = vsub.s32 0, %v1032
    %v1034 = vrot.slane %v1029, %v1033
    %v1037 = vsel %vm65, %v1023, 0
    %v1040 = vsel %vm65, %v1024, 0
    %1042 = vmatprep.subr.mxu0 0.0
    %1043 = vmatpush1.msra.mxu0 0.0
    %1044 = vmatprep.subr.mxu0 0.0
    %1045 = vmatpush1.msra.mxu0 0.0
    %1046 = vmatprep.subr.mxu0 0.0
    %1047 = vmatpush1.msra.mxu0 0.0
    %1048 = vmatprep.subr.mxu0 0.0
    %1049 = vmatpush1.msra.mxu0 0.0
    %1050 = vmatprep.subr.mxu0 0.0
    %1051 = vmatpush1.msra.mxu0 0.0
    %1052 = vmatprep.subr.mxu0 0.0
    %1053 = vmatpush1.msra.mxu0 0.0
    %1054 = vmatprep.subr.mxu0 0.0
    %1055 = vmatpush1.msra.mxu0 0.0
    %1056 = vmatprep.subr.mxu0 0.0
    %1057 = vmatpush1.msra.mxu0 0.0
    %1058 = vmatprep.subr.mxu0 0.0
    %1059 = vmatpush1.msra.mxu0 0.0
    %1060 = vmatprep.subr.mxu0 0.0
    %1061 = vmatpush1.msra.mxu0 0.0
    %1062 = vmatprep.subr.mxu0 0.0
    %1063 = vmatpush1.msra.mxu0 0.0
    %1064 = vmatprep.subr.mxu0 0.0
    %1065 = vmatpush1.msra.mxu0 0.0
    %1066 = vmatprep.subr.mxu0 0.0
    %1067 = vmatpush1.msra.mxu0 %v1028
    %1068 = vmatprep.subr.mxu0 0.0
    %1069 = vmatpush1.msra.mxu0 %v1027
    %1070 = vmatprep.subr.mxu0 0.0
    %1071 = vmatpush1.msra.mxu0 %v1026
    %1072 = vmatprep.subr.mxu0 0.0
    %1073 = vmatpush1.msra.mxu0 %v1025
    %1074 = vmatprep.subr.mxu0 0.0
    %1075 = vmatpush2.msra.mxu0 0.0
    %1076 = vmatprep.subr.mxu0 0.0
    %1077 = vmatpush2.msra.mxu0 0.0
    %1078 = vmatprep.subr.mxu0 0.0
    %1079 = vmatpush2.msra.mxu0 0.0
    %1080 = vmatprep.subr.mxu0 0.0
    %1081 = vmatpush2.msra.mxu0 0.0
    %1082 = vmatprep.subr.mxu0 0.0
    %1083 = vmatpush2.msra.mxu0 0.0
    %1084 = vmatprep.subr.mxu0 0.0
    %1085 = vmatpush2.msra.mxu0 0.0
    %1086 = vmatprep.subr.mxu0 0.0
    %1087 = vmatpush2.msra.mxu0 0.0
    %1088 = vmatprep.subr.mxu0 0.0
    %1089 = vmatpush2.msra.mxu0 0.0
    %1090 = vmatprep.subr.mxu0 0.0
    %1091 = vmatpush2.msra.mxu0 0.0
    %1092 = vmatprep.subr.mxu0 0.0
    %1093 = vmatpush2.msra.mxu0 0.0
    %1094 = vmatprep.subr.mxu0 0.0
    %1095 = vmatpush2.msra.mxu0 0.0
    %1096 = vmatprep.subr.mxu0 0.0
    %1097 = vmatpush2.msra.mxu0 0.0
    %1098 = vmatprep.subr.mxu0 0.0
    %1099 = vmatpush2.msra.mxu0 0.0
    %1100 = vmatprep.subr.mxu0 0.0
    %1101 = vmatpush2.msra.mxu0 0.0
    %1102 = vmatprep.subr.mxu0 0.0
    %1103 = vmatpush2.msra.mxu0 0.0
    %1104 = vmatprep.subr.mxu0 0.0
    %1105 = vmatpush2.msra.mxu0 0.0
    %1106 = vmatprep.mubr.f32.mxu0 0.0
    %1107 = vmatmul.mubr.f32.gmra.mxu0 %v1037
    %v1108 = vpop.f32.mrf.mxu0
    %v1109 = vadd.f32 %v1034, %v1108
    %v1110 = vpop.f32.mrf.mxu0
    %1111 = vmatprep.mubr.f32.mxu0 0.0
    %1112 = vmatmul.mubr.f32.gmra.mxu0 %v1040
    %v1113 = vpop.f32.mrf.mxu0
    %v1114 = vadd.f32 %v1034, %v1113
    %v1115 = vpop.f32.mrf.mxu0
    %1116 = vdwg.mxu0
    %1117 = vst.msk [vmem:[#allocation9] sm:$0xff] %vm65, %v1109
    %1118 = vst.msk [vmem:[#allocation9 + $0x8] sm:$0xff] %vm65, %v1114
    // Predicated region
    $region30: #{tpu_custom_call.1} parent=1 // pred_check
      _
    $region31: #{tpu_custom_call.1} parent=1 // pred_check_branch
      %1120 = sbr.rel (0) target = $region33
    $region32: #{tpu_custom_call.1} parent=1 // pred_region
      %s1122 = ssub.s32 256, 256
      %1123 = vsyncadd [#allocation5], %s1122
      %s1124 = sshll.u32 [#allocation9], 4
      %s1125 = int_to_ptr.vmem [resolvable:$true] %s1124
      %1130 = dma.vmem_to_hbm [thread:$0]  %s1125, 256, %s4, [#allocation5], 128, 128, 8
    $region33: #{tpu_custom_call.1} parent=1 // pred_fallthru
      _
    // Predicated region
    $region34: #{tpu_custom_call.1} parent=1 // pred_check
      _
    $region35: #{tpu_custom_call.1} parent=1 // pred_check_branch
      %1132 = sbr.rel (0) target = $region37
    $region36: #{tpu_custom_call.1} parent=1 // pred_region
      %1133 = dma.done [#allocation5], 256
    $region37: #{tpu_custom_call.1} parent=1 // pred_fallthru
      _
    %1134 = vsyncpa [#allocation4], 1
    %1135 = vsyncpa [#allocation7], 1
    %1136 = vsyncpa [#allocation5], 1

</llo_original>
